<compile_context>
chip_gen: v7x
topology: tpu7x:2x2x1
jax: 0.10.0
libtpu: 0.0.40
codegen_flags: <defaults>
</compile_context>

<pallas_src>
import functools

import jax
import jax.numpy as jnp
from jax.experimental import pallas as pl
from jax.experimental.pallas import tpu as pltpu

_LANE = 128      # TPU lane width   (last dim of a vreg tile)
_SUBLANE = 8     # TPU sublane width (second-to-last dim of a vreg tile)


def _round_up(n, m):
    return ((n + m - 1) // m) * m


def policy_kernel(x_ref, w1t_ref, w2t_ref, out_ref):
    # x_ref   : (bb, S)          state batch tile
    # w1t_ref : (S, H_pad)       layer-1 weight, pre-transposed, lane-padded
    # w2t_ref : (H_pad, A_pad)   layer-2 weight, pre-transposed, lane-padded
    # out_ref : (bb, A_pad)
    # Two back-to-back MXU matmuls; the hidden activation never leaves VMEM.
    h = jnp.dot(x_ref[...], w1t_ref[...], preferred_element_type=jnp.float32)
    out_ref[...] = jnp.dot(
        h, w2t_ref[...], preferred_element_type=jnp.float32
    ).astype(out_ref.dtype)


@functools.partial(jax.jit, static_argnames=("block_b",))
def policy_forward(x, w1, w2, *, block_b=128):
    """Batched Policy forward: y = (x @ w1.T) @ w2.T via one Pallas kernel.

    x  : (B, state_space)        float32
    w1 : (hidden, state_space)   float32   (PyTorch nn.Linear layout)
    w2 : (action, hidden)        float32   (PyTorch nn.Linear layout)
    returns (B, action)          float32
    """
    B, S = x.shape
    H, S_w1 = w1.shape
    A, H_w2 = w2.shape
    assert S_w1 == S and H_w2 == H, "weight shapes inconsistent with input"

    # Lane-dense padded sizes for the hidden and action dims.
    H_pad = _round_up(max(H, _LANE), _LANE)
    A_pad = _round_up(max(A, _LANE), _LANE)

    # Batch tiling: tile is a multiple of 8 sublanes; pad B to whole tiles.
    bb = _round_up(min(block_b, _round_up(B, _SUBLANE)), _SUBLANE)
    B_pad = _round_up(B, bb)

    # Layout plumbing (not compute hoisting): transpose weights to [in, out]
    # so the kernel's contractions feed the MXU with no in-kernel transpose,
    # and zero-pad to lane-dense shapes.
    w1t = jnp.transpose(w1)                      # (S, H)
    w2t = jnp.transpose(w2)                      # (H, A)
    w1t = jnp.pad(w1t, ((0, 0), (0, H_pad - H)))
    w2t = jnp.pad(w2t, ((0, H_pad - H), (0, A_pad - A)))
    x_p = x if B_pad == B else jnp.pad(x, ((0, B_pad - B), (0, 0)))

    grid = (B_pad // bb,)
    cost = pl.CostEstimate(
        flops=2 * B_pad * S * H_pad + 2 * B_pad * H_pad * A_pad,
        transcendentals=0,
        bytes_accessed=4 * (B_pad * S + S * H_pad + H_pad * A_pad
                            + B_pad * A_pad),
    )

    out = pl.pallas_call(
        policy_kernel,
        out_shape=jax.ShapeDtypeStruct((B_pad, A_pad), jnp.float32),
        grid=grid,
        in_specs=[
            pl.BlockSpec((bb, S), lambda i: (i, 0),
                         memory_space=pltpu.MemorySpace.VMEM),
            pl.BlockSpec((S, H_pad), lambda i: (0, 0),
                         memory_space=pltpu.MemorySpace.VMEM),
            pl.BlockSpec((H_pad, A_pad), lambda i: (0, 0),
                         memory_space=pltpu.MemorySpace.VMEM),
        ],
        out_specs=pl.BlockSpec((bb, A_pad), lambda i: (i, 0),
                               memory_space=pltpu.MemorySpace.VMEM),
        compiler_params=pltpu.CompilerParams(
            dimension_semantics=("parallel",),
        ),
        cost_estimate=cost,
    )(x_p, w1t, w2t)

    return out[:B, :A]


if __name__ == "__main__":
    # Small shapes consistent with a CartPole-style DeepSARSA setup:
    #   state_space = 4, action_space = 2, hidden_units = 32, batch = 128.
    batch, state_space, hidden, action_space = 128, 4, 32, 2

    key = jax.random.PRNGKey(0)
    kx, k1, k2 = jax.random.split(key, 3)

    x = jax.random.normal(kx, (batch, state_space), dtype=jnp.float32)

    # Deterministic PyTorch-style init: U(-1/sqrt(fan_in), 1/sqrt(fan_in)).
    bound1 = 1.0 / (state_space ** 0.5)
    bound2 = 1.0 / (hidden ** 0.5)
    w1 = jax.random.uniform(k1, (hidden, state_space), jnp.float32,
                            -bound1, bound1)
    w2 = jax.random.uniform(k2, (action_space, hidden), jnp.float32,
                            -bound2, bound2)

    out = policy_forward(x, w1, w2)
    out = jax.block_until_ready(out)

    # Pure-JAX reference of the original two-linear-layer forward.
    ref = (x @ w1.T) @ w2.T
    assert out.shape == (batch, action_space)
    assert jnp.allclose(out, ref, atol=1e-5, rtol=1e-5), "mismatch vs reference"

    print("KERNEL_OK")
</pallas_src>

<mosaic_0001>
module attributes {stable_mosaic.version = 11 : i64} {
  func.func @policy_kernel(%arg0: i32, %arg1: memref<128x4xf32, #tpu.memory_space<vmem>>, %arg2: memref<4x128xf32, #tpu.memory_space<vmem>>, %arg3: memref<128x128xf32, #tpu.memory_space<vmem>>, %arg4: memref<128x128xf32, #tpu.memory_space<vmem>>) attributes {dimension_semantics = [#tpu.dimension_semantics<parallel>], iteration_bounds = array<i64: 1>, scalar_prefetch = 0 : i64, scratch_operands = 0 : i64, tpu.core_type = #tpu.core_type<tc>, window_params = [{transform_indices = @transform_0, window_bounds = array<i64: 128, 4>}, {pipeline_mode = #tpu.pipeline_mode<synchronous>, transform_indices = @transform_1, window_bounds = array<i64: 4, 128>}, {pipeline_mode = #tpu.pipeline_mode<synchronous>, transform_indices = @transform_2, window_bounds = array<i64: 128, 128>}, {transform_indices = @transform_3, window_bounds = array<i64: 128, 128>}]} {
    %c0 = arith.constant 0 : index
    %c0_0 = arith.constant 0 : index
    %0 = vector.load %arg1[%c0, %c0_0] : memref<128x4xf32, #tpu.memory_space<vmem>>, vector<128x4xf32>
    %c0_1 = arith.constant 0 : index
    %c0_2 = arith.constant 0 : index
    %1 = vector.load %arg2[%c0_1, %c0_2] : memref<4x128xf32, #tpu.memory_space<vmem>>, vector<4x128xf32>
    %cst = arith.constant dense<0.000000e+00> : vector<128x128xf32>
    %2 = tpu.matmul %0, %1, %cst {dimension_numbers = #tpu.dot_dimension_numbers<[1], [0], [0], [1], [0, 0, 1, 1], [], []>} : vector<128x4xf32>, vector<4x128xf32>, vector<128x128xf32> -> vector<128x128xf32>
    %c0_3 = arith.constant 0 : index
    %c0_4 = arith.constant 0 : index
    %3 = vector.load %arg3[%c0_3, %c0_4] : memref<128x128xf32, #tpu.memory_space<vmem>>, vector<128x128xf32>
    %cst_5 = arith.constant dense<0.000000e+00> : vector<128x128xf32>
    %4 = tpu.matmul %2, %3, %cst_5 {dimension_numbers = #tpu.dot_dimension_numbers<[1], [0], [0], [1], [0, 0, 1, 1], [], []>} : vector<128x128xf32>, vector<128x128xf32>, vector<128x128xf32> -> vector<128x128xf32>
    %c0_6 = arith.constant 0 : index
    %c0_7 = arith.constant 0 : index
    %5 = vector.load %arg4[%c0_6, %c0_7] : memref<128x128xf32, #tpu.memory_space<vmem>>, vector<128x128xf32>
    tpu.vector_store %arg4[%c0_6, %c0_7], %4 {strides = array<i32>} : memref<128x128xf32, #tpu.memory_space<vmem>>, vector<128x128xf32>,
    return
  }
  func.func @transform_0(%arg0: i32) -> (i32, i32) {
    %c0_i32 = arith.constant 0 : i32
    %c0_i32_0 = arith.constant 0 : i32
    return %arg0, %c0_i32 : i32, i32
  }
  func.func @transform_1(%arg0: i32) -> (i32, i32) {
    %c0_i32 = arith.constant 0 : i32
    %c0_i32_0 = arith.constant 0 : i32
    %c0_i32_1 = arith.constant 0 : i32
    return %c0_i32, %c0_i32_0 : i32, i32
  }
  func.func @transform_2(%arg0: i32) -> (i32, i32) {
    %c0_i32 = arith.constant 0 : i32
    %c0_i32_0 = arith.constant 0 : i32
    %c0_i32_1 = arith.constant 0 : i32
    return %c0_i32, %c0_i32_0 : i32, i32
  }
  func.func @transform_3(%arg0: i32) -> (i32, i32) {
    %c0_i32 = arith.constant 0 : i32
    %c0_i32_0 = arith.constant 0 : i32
    return %arg0, %c0_i32 : i32, i32
  }
}

</mosaic_0001>

<llo_original>
// kernel: policy_forward.1
$region0: #{policy_forward.1}
  #allocation0 [shape = 'u32[]', space=smem, size = 0x4, offset = 0x4, fixed_abs, tag = 'smem constant byte address 0x4 - core index']
  #allocation1 [shape = 'u32[144,128]{1,0:T(1,128)}', space=vmem, size = 0x12000, scoped, tag = 'internal scratch']
  %s0 = inlined_call_operand.vmem [shape: f32[128,4], index: 0, kind: input, shape index: {}]
  %s1 = inlined_call_operand.vmem [shape: f32[4,128], index: 1, kind: input, shape index: {}]
  %s2 = inlined_call_operand.vmem [shape: f32[128,128], index: 2, kind: input, shape index: {}]
  %s3 = inlined_call_operand.vmem [shape: f32[128,128], index: 3, kind: output, shape index: {}]
  %s4 = sld [smem:[#allocation0]]
  $region22: #{policy_forward.1} parent=0
    _
  %s6 = ssub.s32 1, %s4
  %s7 = scalar_select 0, %s6, %s4
  // Predicated region
  $region2: #{policy_forward.1} parent=0 // pred_check
    _
  $region3: #{policy_forward.1} parent=0 // pred_check_branch
    %9 = sbr.rel (0) target = $region5
  $region4: #{policy_forward.1} parent=0 // pred_region
    _
  $region5: #{policy_forward.1} parent=0 // pred_fallthru
    _
  // Predicated region
  $region6: #{policy_forward.1} parent=0 // pred_check
    _
  $region7: #{policy_forward.1} parent=0 // pred_check_branch
    %11 = sbr.rel (0) target = $region9
  $region8: #{policy_forward.1} parent=0 // pred_region
    _
  $region9: #{policy_forward.1} parent=0 // pred_fallthru
    _
  // Predicated region
  $region10: #{policy_forward.1} parent=0 // pred_check
    _
  $region11: #{policy_forward.1} parent=0 // pred_check_branch
    %13 = sbr.rel (0) target = $region13
  $region12: #{policy_forward.1} parent=0 // pred_region
    _
  $region13: #{policy_forward.1} parent=0 // pred_fallthru
    _
  %v14 = vld [vmem:[%s0] sm:$0xff]
  %v15 = vld [vmem:[%s0 + $0x8] sm:$0xff]
  %v16 = vld [vmem:[%s0 + $0x10] sm:$0xff]
  %v17 = vld [vmem:[%s0 + $0x18] sm:$0xff]
  %v18 = vld [vmem:[%s0 + $0x20] sm:$0xff]
  %v19 = vld [vmem:[%s0 + $0x28] sm:$0xff]
  %v20 = vld [vmem:[%s0 + $0x30] sm:$0xff]
  %v21 = vld [vmem:[%s0 + $0x38] sm:$0xff]
  %v22 = vld [vmem:[%s0 + $0x40] sm:$0xff]
  %v23 = vld [vmem:[%s0 + $0x48] sm:$0xff]
  %v24 = vld [vmem:[%s0 + $0x50] sm:$0xff]
  %v25 = vld [vmem:[%s0 + $0x58] sm:$0xff]
  %v26 = vld [vmem:[%s0 + $0x60] sm:$0xff]
  %v27 = vld [vmem:[%s0 + $0x68] sm:$0xff]
  %v28 = vld [vmem:[%s0 + $0x70] sm:$0xff]
  %v29 = vld [vmem:[%s0 + $0x78] sm:$0xff]
  %v30 = vld [vmem:[%s1] sm:$0xf]
  %vm31 = vcmask 31744
  %v33 = vsel %vm31, %v14, 0
  %v36 = vsel %vm31, %v15, 0
  %v39 = vsel %vm31, %v16, 0
  %v42 = vsel %vm31, %v17, 0
  %v45 = vsel %vm31, %v18, 0
  %v48 = vsel %vm31, %v19, 0
  %v51 = vsel %vm31, %v20, 0
  %v54 = vsel %vm31, %v21, 0
  %v57 = vsel %vm31, %v22, 0
  %v60 = vsel %vm31, %v23, 0
  %v63 = vsel %vm31, %v24, 0
  %v66 = vsel %vm31, %v25, 0
  %v69 = vsel %vm31, %v26, 0
  %v72 = vsel %vm31, %v27, 0
  %v75 = vsel %vm31, %v28, 0
  %v78 = vsel %vm31, %v29, 0
  %vm80 = vcmask 1043456
  %v82 = vsel %vm80, %v30, 0
  %84 = vmatprep.subr.mxu0 0.0
  %85 = vmatpush1.msra.mxu0 %v82
  %86 = vmatprep.subr.mxu0 0.0
  %87 = vmatpush1.msra.mxu0 0.0
  %88 = vmatprep.subr.mxu0 0.0
  %89 = vmatpush1.msra.mxu0 0.0
  %90 = vmatprep.subr.mxu0 0.0
  %91 = vmatpush1.msra.mxu0 0.0
  %92 = vmatprep.subr.mxu0 0.0
  %93 = vmatpush1.msra.mxu0 0.0
  %94 = vmatprep.subr.mxu0 0.0
  %95 = vmatpush1.msra.mxu0 0.0
  %96 = vmatprep.subr.mxu0 0.0
  %97 = vmatpush1.msra.mxu0 0.0
  %98 = vmatprep.subr.mxu0 0.0
  %99 = vmatpush1.msra.mxu0 0.0
  %100 = vmatprep.subr.mxu0 0.0
  %101 = vmatpush1.msra.mxu0 0.0
  %102 = vmatprep.subr.mxu0 0.0
  %103 = vmatpush1.msra.mxu0 0.0
  %104 = vmatprep.subr.mxu0 0.0
  %105 = vmatpush1.msra.mxu0 0.0
  %106 = vmatprep.subr.mxu0 0.0
  %107 = vmatpush1.msra.mxu0 0.0
  %108 = vmatprep.subr.mxu0 0.0
  %109 = vmatpush1.msra.mxu0 0.0
  %110 = vmatprep.subr.mxu0 0.0
  %111 = vmatpush1.msra.mxu0 0.0
  %112 = vmatprep.subr.mxu0 0.0
  %113 = vmatpush1.msra.mxu0 0.0
  %114 = vmatprep.subr.mxu0 0.0
  %115 = vmatpush1.msra.mxu0 0.0
  %116 = vmatprep.subr.mxu0 0.0
  %117 = vmatpush1.msra.mxu0 0.0
  %118 = vmatprep.subr.mxu0 0.0
  %119 = vmatpush1.msra.mxu0 0.0
  %120 = vmatprep.subr.mxu0 0.0
  %121 = vmatpush1.msra.mxu0 0.0
  %122 = vmatprep.subr.mxu0 0.0
  %123 = vmatpush1.msra.mxu0 0.0
  %124 = vmatprep.subr.mxu0 0.0
  %125 = vmatpush1.msra.mxu0 0.0
  %126 = vmatprep.subr.mxu0 0.0
  %127 = vmatpush1.msra.mxu0 0.0
  %128 = vmatprep.subr.mxu0 0.0
  %129 = vmatpush1.msra.mxu0 0.0
  %130 = vmatprep.subr.mxu0 0.0
  %131 = vmatpush1.msra.mxu0 0.0
  %132 = vmatprep.subr.mxu0 0.0
  %133 = vmatpush1.msra.mxu0 0.0
  %134 = vmatprep.subr.mxu0 0.0
  %135 = vmatpush1.msra.mxu0 0.0
  %136 = vmatprep.subr.mxu0 0.0
  %137 = vmatpush1.msra.mxu0 0.0
  %138 = vmatprep.subr.mxu0 0.0
  %139 = vmatpush1.msra.mxu0 0.0
  %140 = vmatprep.subr.mxu0 0.0
  %141 = vmatpush1.msra.mxu0 0.0
  %142 = vmatprep.subr.mxu0 0.0
  %143 = vmatpush1.msra.mxu0 0.0
  %144 = vmatprep.subr.mxu0 0.0
  %145 = vmatpush1.msra.mxu0 0.0
  %146 = vmatprep.subr.mxu0 0.0
  %147 = vmatpush1.msra.mxu0 0.0
  %148 = vmatprep.mubr.f32.mxu0 0.0
  %149 = vmatmul.mubr.f32.gmra.mrb[0].mxu0 %v33
  %v150 = vpop.f32.mrb[0].mxu0
  %v151 = vadd.f32 0.0, %v150
  %v152 = vpop.f32.mrb[0].mxu0
  %153 = vmatprep.mubr.f32.mxu0 0.0
  %154 = vmatmul.mubr.f32.gmra.mrb[0].mxu0 %v36
  %v155 = vpop.f32.mrb[0].mxu0
  %v156 = vadd.f32 0.0, %v155
  %v157 = vpop.f32.mrb[0].mxu0
  %158 = vmatprep.mubr.f32.mxu0 0.0
  %159 = vmatmul.mubr.f32.gmra.mrb[0].mxu0 %v39
  %v160 = vpop.f32.mrb[0].mxu0
  %v161 = vadd.f32 0.0, %v160
  %v162 = vpop.f32.mrb[0].mxu0
  %163 = vmatprep.mubr.f32.mxu0 0.0
  %164 = vmatmul.mubr.f32.gmra.mrb[0].mxu0 %v42
  %v165 = vpop.f32.mrb[0].mxu0
  %v166 = vadd.f32 0.0, %v165
  %v167 = vpop.f32.mrb[0].mxu0
  %168 = vmatprep.mubr.f32.mxu0 0.0
  %169 = vmatmul.mubr.f32.gmra.mrb[0].mxu0 %v45
  %v170 = vpop.f32.mrb[0].mxu0
  %v171 = vadd.f32 0.0, %v170
  %v172 = vpop.f32.mrb[0].mxu0
  %173 = vmatprep.mubr.f32.mxu0 0.0
  %174 = vmatmul.mubr.f32.gmra.mrb[0].mxu0 %v48
  %v175 = vpop.f32.mrb[0].mxu0
  %v176 = vadd.f32 0.0, %v175
  %v177 = vpop.f32.mrb[0].mxu0
  %178 = vmatprep.mubr.f32.mxu0 0.0
  %179 = vmatmul.mubr.f32.gmra.mrb[0].mxu0 %v51
  %v180 = vpop.f32.mrb[0].mxu0
  %v181 = vadd.f32 0.0, %v180
  %v182 = vpop.f32.mrb[0].mxu0
  %183 = vmatprep.mubr.f32.mxu0 0.0
  %184 = vmatmul.mubr.f32.gmra.mrb[0].mxu0 %v54
  %v185 = vpop.f32.mrb[0].mxu0
  %v186 = vadd.f32 0.0, %v185
  %v187 = vpop.f32.mrb[0].mxu0
  %188 = vmatprep.mubr.f32.mxu0 0.0
  %189 = vmatmul.mubr.f32.gmra.mrb[0].mxu0 %v57
  %v190 = vpop.f32.mrb[0].mxu0
  %v191 = vadd.f32 0.0, %v190
  %v192 = vpop.f32.mrb[0].mxu0
  %193 = vmatprep.mubr.f32.mxu0 0.0
  %194 = vmatmul.mubr.f32.gmra.mrb[0].mxu0 %v60
  %v195 = vpop.f32.mrb[0].mxu0
  %v196 = vadd.f32 0.0, %v195
  %v197 = vpop.f32.mrb[0].mxu0
  %198 = vmatprep.mubr.f32.mxu0 0.0
  %199 = vmatmul.mubr.f32.gmra.mrb[0].mxu0 %v63
  %v200 = vpop.f32.mrb[0].mxu0
  %v201 = vadd.f32 0.0, %v200
  %v202 = vpop.f32.mrb[0].mxu0
  %203 = vmatprep.mubr.f32.mxu0 0.0
  %204 = vmatmul.mubr.f32.gmra.mrb[0].mxu0 %v66
  %v205 = vpop.f32.mrb[0].mxu0
  %v206 = vadd.f32 0.0, %v205
  %v207 = vpop.f32.mrb[0].mxu0
  %208 = vmatprep.mubr.f32.mxu0 0.0
  %209 = vmatmul.mubr.f32.gmra.mrb[0].mxu0 %v69
  %v210 = vpop.f32.mrb[0].mxu0
  %v211 = vadd.f32 0.0, %v210
  %v212 = vpop.f32.mrb[0].mxu0
  %213 = vmatprep.mubr.f32.mxu0 0.0
  %214 = vmatmul.mubr.f32.gmra.mrb[0].mxu0 %v72
  %v215 = vpop.f32.mrb[0].mxu0
  %v216 = vadd.f32 0.0, %v215
  %v217 = vpop.f32.mrb[0].mxu0
  %218 = vmatprep.mubr.f32.mxu0 0.0
  %219 = vmatmul.mubr.f32.gmra.mrb[0].mxu0 %v75
  %v220 = vpop.f32.mrb[0].mxu0
  %v221 = vadd.f32 0.0, %v220
  %v222 = vpop.f32.mrb[0].mxu0
  %223 = vmatprep.mubr.f32.mxu0 0.0
  %224 = vmatmul.mubr.f32.gmra.mrb[0].mxu0 %v78
  %v225 = vpop.f32.mrb[0].mxu0
  %v226 = vadd.f32 0.0, %v225
  %v227 = vpop.f32.mrb[0].mxu0
  %228 = vdwg.mxu0
  %v229 = vld [vmem:[%s2] sm:$0xff]
  %v230 = vld [vmem:[%s2 + $0x8] sm:$0xff]
  %v231 = vld [vmem:[%s2 + $0x10] sm:$0xff]
  %v232 = vld [vmem:[%s2 + $0x18] sm:$0xff]
  %v233 = vld [vmem:[%s2 + $0x20] sm:$0xff]
  %v234 = vld [vmem:[%s2 + $0x28] sm:$0xff]
  %v235 = vld [vmem:[%s2 + $0x30] sm:$0xff]
  %v236 = vld [vmem:[%s2 + $0x38] sm:$0xff]
  %v237 = vld [vmem:[%s2 + $0x40] sm:$0xff]
  %v238 = vld [vmem:[%s2 + $0x48] sm:$0xff]
  %v239 = vld [vmem:[%s2 + $0x50] sm:$0xff]
  %v240 = vld [vmem:[%s2 + $0x58] sm:$0xff]
  %v241 = vld [vmem:[%s2 + $0x60] sm:$0xff]
  %v242 = vld [vmem:[%s2 + $0x68] sm:$0xff]
  %v243 = vld [vmem:[%s2 + $0x70] sm:$0xff]
  %v244 = vld [vmem:[%s2 + $0x78] sm:$0xff]
  %245 = vmatprep.subr.mxu0 0.0
  %246 = vmatpush1.msra.mxu0 %v229
  %247 = vmatprep.subr.mxu0 0.0
  %248 = vmatpush1.msra.mxu0 %v230
  %249 = vmatprep.subr.mxu0 0.0
  %250 = vmatpush1.msra.mxu0 %v231
  %251 = vmatprep.subr.mxu0 0.0
  %252 = vmatpush1.msra.mxu0 %v232
  %253 = vmatprep.subr.mxu0 0.0
  %254 = vmatpush1.msra.mxu0 %v233
  %255 = vmatprep.subr.mxu0 0.0
  %256 = vmatpush1.msra.mxu0 %v234
  %257 = vmatprep.subr.mxu0 0.0
  %258 = vmatpush1.msra.mxu0 %v235
  %259 = vmatprep.subr.mxu0 0.0
  %260 = vmatpush1.msra.mxu0 %v236
  %261 = vmatprep.subr.mxu0 0.0
  %262 = vmatpush1.msra.mxu0 %v237
  %263 = vmatprep.subr.mxu0 0.0
  %264 = vmatpush1.msra.mxu0 %v238
  %265 = vmatprep.subr.mxu0 0.0
  %266 = vmatpush1.msra.mxu0 %v239
  %267 = vmatprep.subr.mxu0 0.0
  %268 = vmatpush1.msra.mxu0 %v240
  %269 = vmatprep.subr.mxu0 0.0
  %270 = vmatpush1.msra.mxu0 %v241
  %271 = vmatprep.subr.mxu0 0.0
  %272 = vmatpush1.msra.mxu0 %v242
  %273 = vmatprep.subr.mxu0 0.0
  %274 = vmatpush1.msra.mxu0 %v243
  %275 = vmatprep.subr.mxu0 0.0
  %276 = vmatpush1.msra.mxu0 %v244
  %277 = vmatprep.subr.mxu0 0.0
  %278 = vmatpush1.msra.mxu0 0.0
  %279 = vmatprep.subr.mxu0 0.0
  %280 = vmatpush1.msra.mxu0 0.0
  %281 = vmatprep.subr.mxu0 0.0
  %282 = vmatpush1.msra.mxu0 0.0
  %283 = vmatprep.subr.mxu0 0.0
  %284 = vmatpush1.msra.mxu0 0.0
  %285 = vmatprep.subr.mxu0 0.0
  %286 = vmatpush1.msra.mxu0 0.0
  %287 = vmatprep.subr.mxu0 0.0
  %288 = vmatpush1.msra.mxu0 0.0
  %289 = vmatprep.subr.mxu0 0.0
  %290 = vmatpush1.msra.mxu0 0.0
  %291 = vmatprep.subr.mxu0 0.0
  %292 = vmatpush1.msra.mxu0 0.0
  %293 = vmatprep.subr.mxu0 0.0
  %294 = vmatpush1.msra.mxu0 0.0
  %295 = vmatprep.subr.mxu0 0.0
  %296 = vmatpush1.msra.mxu0 0.0
  %297 = vmatprep.subr.mxu0 0.0
  %298 = vmatpush1.msra.mxu0 0.0
  %299 = vmatprep.subr.mxu0 0.0
  %300 = vmatpush1.msra.mxu0 0.0
  %301 = vmatprep.subr.mxu0 0.0
  %302 = vmatpush1.msra.mxu0 0.0
  %303 = vmatprep.subr.mxu0 0.0
  %304 = vmatpush1.msra.mxu0 0.0
  %305 = vmatprep.subr.mxu0 0.0
  %306 = vmatpush1.msra.mxu0 0.0
  %307 = vmatprep.subr.mxu0 0.0
  %308 = vmatpush1.msra.mxu0 0.0
  %309 = vmatprep.mubr.f32.mxu0 0.0
  %310 = vmatmul.mubr.f32.gmra.mrb[0].mxu0 %v151
  %v311 = vpop.f32.mrb[0].mxu0
  %v312 = vadd.f32 0.0, %v311
  %v313 = vpop.f32.mrb[0].mxu0
  %314 = vmatprep.mubr.f32.mxu0 0.0
  %315 = vmatmul.mubr.f32.gmra.mrb[0].mxu0 %v156
  %v316 = vpop.f32.mrb[0].mxu0
  %v317 = vadd.f32 0.0, %v316
  %v318 = vpop.f32.mrb[0].mxu0
  %319 = vmatprep.mubr.f32.mxu0 0.0
  %320 = vmatmul.mubr.f32.gmra.mrb[0].mxu0 %v161
  %v321 = vpop.f32.mrb[0].mxu0
  %v322 = vadd.f32 0.0, %v321
  %v323 = vpop.f32.mrb[0].mxu0
  %324 = vmatprep.mubr.f32.mxu0 0.0
  %325 = vmatmul.mubr.f32.gmra.mrb[0].mxu0 %v166
  %v326 = vpop.f32.mrb[0].mxu0
  %v327 = vadd.f32 0.0, %v326
  %v328 = vpop.f32.mrb[0].mxu0
  %329 = vmatprep.mubr.f32.mxu0 0.0
  %330 = vmatmul.mubr.f32.gmra.mrb[0].mxu0 %v171
  %v331 = vpop.f32.mrb[0].mxu0
  %v332 = vadd.f32 0.0, %v331
  %v333 = vpop.f32.mrb[0].mxu0
  %334 = vmatprep.mubr.f32.mxu0 0.0
  %335 = vmatmul.mubr.f32.gmra.mrb[0].mxu0 %v176
  %v336 = vpop.f32.mrb[0].mxu0
  %v337 = vadd.f32 0.0, %v336
  %v338 = vpop.f32.mrb[0].mxu0
  %339 = vmatprep.mubr.f32.mxu0 0.0
  %340 = vmatmul.mubr.f32.gmra.mrb[0].mxu0 %v181
  %v341 = vpop.f32.mrb[0].mxu0
  %v342 = vadd.f32 0.0, %v341
  %v343 = vpop.f32.mrb[0].mxu0
  %344 = vmatprep.mubr.f32.mxu0 0.0
  %345 = vmatmul.mubr.f32.gmra.mrb[0].mxu0 %v186
  %v346 = vpop.f32.mrb[0].mxu0
  %v347 = vadd.f32 0.0, %v346
  %v348 = vpop.f32.mrb[0].mxu0
  %349 = vmatprep.mubr.f32.mxu0 0.0
  %350 = vmatmul.mubr.f32.gmra.mrb[0].mxu0 %v191
  %v351 = vpop.f32.mrb[0].mxu0
  %v352 = vadd.f32 0.0, %v351
  %v353 = vpop.f32.mrb[0].mxu0
  %354 = vmatprep.mubr.f32.mxu0 0.0
  %355 = vmatmul.mubr.f32.gmra.mrb[0].mxu0 %v196
  %v356 = vpop.f32.mrb[0].mxu0
  %v357 = vadd.f32 0.0, %v356
  %v358 = vpop.f32.mrb[0].mxu0
  %359 = vmatprep.mubr.f32.mxu0 0.0
  %360 = vmatmul.mubr.f32.gmra.mrb[0].mxu0 %v201
  %v361 = vpop.f32.mrb[0].mxu0
  %v362 = vadd.f32 0.0, %v361
  %v363 = vpop.f32.mrb[0].mxu0
  %364 = vmatprep.mubr.f32.mxu0 0.0
  %365 = vmatmul.mubr.f32.gmra.mrb[0].mxu0 %v206
  %v366 = vpop.f32.mrb[0].mxu0
  %v367 = vadd.f32 0.0, %v366
  %v368 = vpop.f32.mrb[0].mxu0
  %369 = vmatprep.mubr.f32.mxu0 0.0
  %370 = vmatmul.mubr.f32.gmra.mrb[0].mxu0 %v211
  %v371 = vpop.f32.mrb[0].mxu0
  %v372 = vadd.f32 0.0, %v371
  %v373 = vpop.f32.mrb[0].mxu0
  %374 = vmatprep.mubr.f32.mxu0 0.0
  %375 = vmatmul.mubr.f32.gmra.mrb[0].mxu0 %v216
  %v376 = vpop.f32.mrb[0].mxu0
  %v377 = vadd.f32 0.0, %v376
  %v378 = vpop.f32.mrb[0].mxu0
  %379 = vmatprep.mubr.f32.mxu0 0.0
  %380 = vmatmul.mubr.f32.gmra.mrb[0].mxu0 %v221
  %v381 = vpop.f32.mrb[0].mxu0
  %v382 = vadd.f32 0.0, %v381
  %v383 = vpop.f32.mrb[0].mxu0
  %384 = vmatprep.mubr.f32.mxu0 0.0
  %385 = vmatmul.mubr.f32.gmra.mrb[0].mxu0 %v226
  %v386 = vpop.f32.mrb[0].mxu0
  %v387 = vadd.f32 0.0, %v386
  %v388 = vpop.f32.mrb[0].mxu0
  %389 = vdwg.mxu0
  %390 = vst [vmem:[%s3] sm:$0xff] %v312
  %391 = vst [vmem:[%s3 + $0x8] sm:$0xff] %v317
  %392 = vst [vmem:[%s3 + $0x10] sm:$0xff] %v322
  %393 = vst [vmem:[%s3 + $0x18] sm:$0xff] %v327
  %394 = vst [vmem:[%s3 + $0x20] sm:$0xff] %v332
  %395 = vst [vmem:[%s3 + $0x28] sm:$0xff] %v337
  %396 = vst [vmem:[%s3 + $0x30] sm:$0xff] %v342
  %397 = vst [vmem:[%s3 + $0x38] sm:$0xff] %v347
  %398 = vst [vmem:[%s3 + $0x40] sm:$0xff] %v352
  %399 = vst [vmem:[%s3 + $0x48] sm:$0xff] %v357
  %400 = vst [vmem:[%s3 + $0x50] sm:$0xff] %v362
  %401 = vst [vmem:[%s3 + $0x58] sm:$0xff] %v367
  %402 = vst [vmem:[%s3 + $0x60] sm:$0xff] %v372
  %403 = vst [vmem:[%s3 + $0x68] sm:$0xff] %v377
  %404 = vst [vmem:[%s3 + $0x70] sm:$0xff] %v382
  %405 = vst [vmem:[%s3 + $0x78] sm:$0xff] %v387
  // Predicated region
  $region14: #{policy_forward.1} parent=0 // pred_check
    _
  $region15: #{policy_forward.1} parent=0 // pred_check_branch
    %407 = sbr.rel (0) target = $region17
  $region16: #{policy_forward.1} parent=0 // pred_region
    _
  $region17: #{policy_forward.1} parent=0 // pred_fallthru
    _
  // Predicated region
  $region18: #{policy_forward.1} parent=0 // pred_check
    _
  $region19: #{policy_forward.1} parent=0 // pred_check_branch
    %409 = sbr.rel (0) target = $region21
  $region20: #{policy_forward.1} parent=0 // pred_region
    _
  $region21: #{policy_forward.1} parent=0 // pred_fallthru
    _

</llo_original>
